<compile_context>
chip_gen: v5e
topology: v5e:2x2
jax: 0.10.0
libtpu: 0.0.40
codegen_flags: <defaults>
</compile_context>

<pallas_src>
import jax
import jax.numpy as jnp
from jax.experimental import pallas as pl
from jax.experimental.pallas import tpu as pltpu

_PAD = 128  # lane width: every layer's output width is padded to this


def _round_up(x, m):
    return ((x + m - 1) // m) * m


def _mlp_kernel(x_ref, w1_ref, wr_ref, b_ref, o_ref):
    """Fused 5-layer MLP. All layer widths pre-padded to 128 lanes.

    x_ref : (tile_b, in_features)   HBM dtype (e.g. f32) — cast in-kernel
    w1_ref: (in_features, 128)      compute dtype (bf16)
    wr_ref: (4, 128, 128)           compute dtype   (L2, L3, LP, LF, zero-padded)
    b_ref : (5, 128)                f32             (b1..bf, zero-padded)
    o_ref : (tile_b, 128)           compute dtype (bf16 writeback)
    """
    cdt = w1_ref.dtype
    # L1 + ReLU (cast x to compute dtype here — free VPU work under the MXU)
    z = jnp.dot(x_ref[...].astype(cdt), w1_ref[...],
                preferred_element_type=jnp.float32)
    z = jnp.maximum(z + b_ref[0:1, :], 0.0).astype(cdt)
    # L2 / L3 / LP + ReLU — carry bf16 between layers to halve spill traffic
    for i in range(3):
        z = jnp.dot(z, wr_ref[i], preferred_element_type=jnp.float32)
        z = jnp.maximum(z + b_ref[i + 1:i + 2, :], 0.0).astype(cdt)
    # LF (no activation)
    z = jnp.dot(z, wr_ref[3], preferred_element_type=jnp.float32)
    o_ref[...] = (z + b_ref[4:5, :]).astype(o_ref.dtype)


def _pack_params(params, compute_dtype):
    """Zero-pad every layer width to 128 lanes and pack weights/biases."""
    (w1, b1), (w2, b2), (w3, b3), (wp, bp), (wf, bf) = params

    def pad_w(w):
        di, do = w.shape
        return jnp.pad(w, ((0, _PAD - di), (0, _PAD - do)))

    def pad_b(b):
        b = jnp.reshape(b, (-1,)).astype(jnp.float32)
        return jnp.pad(b, (0, _PAD - b.shape[0]))

    w1p = w1.astype(compute_dtype)                                     # (in_f, 128)
    wr = jnp.stack([pad_w(w2), pad_w(w3), pad_w(wp), pad_w(wf)])       # (4, 128, 128)
    wr = wr.astype(compute_dtype)
    b_all = jnp.stack([pad_b(b1), pad_b(b2), pad_b(b3), pad_b(bp), pad_b(bf)])  # (5,128) f32
    return w1p, wr, b_all


def _choose_tile(B, in_features, x_itemsize, tile_b):
    """Pick a batch tile: large enough to amortize step overhead, small enough for VMEM,
    and (for B > tile_b) yielding >= 2 balanced grid steps so both v7x TCs are used."""
    bytes_per_row = max(1, in_features * x_itemsize)
    # Cap so the double-buffered x tile stays within ~16 MiB of VMEM.
    cap = (16 * 1024 * 1024) // (2 * bytes_per_row)
    cap = max(128, (cap // 128) * 128)
    tile_b = min(tile_b, cap)
    if B <= tile_b:
        return _round_up(B, 8)
    half = _round_up((B + 1) // 2, 128)     # >= 2 balanced steps
    return min(tile_b, half)


def fully_connected_forward(x, params, *, tile_b=2048, compute_dtype=jnp.bfloat16,
                            return_padded=False):
    """Forward pass of FullyConnected (return_latent=False, return_penultimate_postact=False).

    Output dtype is `compute_dtype` (bf16 writeback; accumulation is f32 inside the kernel).
    With return_padded=True the raw (Bp, 128) kernel output is returned (no extra slice pass);
    the real result is out[:B, :out_features].
    """
    B, in_features = x.shape
    out_features = params[-1][0].shape[1]

    w1p, wr, b_all = _pack_params(params, compute_dtype)

    x_itemsize = jnp.dtype(x.dtype).itemsize
    cdt_itemsize = jnp.dtype(compute_dtype).itemsize

    tile = _choose_tile(B, in_features, x_itemsize, tile_b)
    Bp = _round_up(B, tile)
    grid = (Bp // tile,)

    # Only a row pad (no dtype cast pass): x keeps its HBM dtype.
    x_pad = x if Bp == B else jnp.pad(x, ((0, Bp - B), (0, 0)))

    # Explicit scoped-VMEM limit: double-buffered x + out tiles, weights (x2), headroom.
    vmem_bytes = (2 * tile * in_features * x_itemsize
                  + 2 * tile * _PAD * cdt_itemsize
                  + 2 * (w1p.size * cdt_itemsize + wr.size * cdt_itemsize + b_all.size * 4)
                  + (4 << 20))
    vmem_limit = int(min(max(vmem_bytes, 32 << 20), 48 << 20))

    # Advisory cost estimate for XLA's scheduler.
    flops = 2 * Bp * (in_features * _PAD + 4 * _PAD * _PAD)
    bytes_accessed = (x_pad.size * x_itemsize
                      + w1p.size * cdt_itemsize
                      + wr.size * cdt_itemsize
                      + b_all.size * 4
                      + Bp * _PAD * cdt_itemsize)

    def full_block(a):
        # Constant index map -> Pallas DMAs these weight/bias blocks only once.
        return pl.BlockSpec(a.shape, lambda i, _nd=a.ndim: (0,) * _nd)

    out_pad = pl.pallas_call(
        _mlp_kernel,
        out_shape=jax.ShapeDtypeStruct((Bp, _PAD), compute_dtype),
        grid_spec=pltpu.PrefetchScalarGridSpec(
            num_scalar_prefetch=0,
            grid=grid,
            in_specs=[
                pl.BlockSpec((tile, in_features), lambda i: (i, 0)),   # x batch tile
                full_block(w1p),                                       # L1 weight
                full_block(wr),                                        # L2..LF weights
                full_block(b_all),                                     # all biases
            ],
            out_specs=pl.BlockSpec((tile, _PAD), lambda i: (i, 0)),
        ),
        compiler_params=pltpu.CompilerParams(
            # parallel batch axis -> shards across the 2 TensorCores on v7x
            dimension_semantics=("parallel",),
            vmem_limit_bytes=vmem_limit),
        cost_estimate=pl.CostEstimate(
            flops=flops, transcendentals=0, bytes_accessed=bytes_accessed),
    )(x_pad, w1p, wr, b_all)

    if return_padded:
        return out_pad
    # Slice off padded batch rows and padded output lanes (extra pass; callers that can
    # consume the padded buffer should pass return_padded=True instead).
    return out_pad[:B, :out_features]


def init_params(key, in_features, out_features, dtype=jnp.float32):
    """Deterministic init mimicking nn.Linear default (U(-1/sqrt(fan_in), 1/sqrt(fan_in)))."""
    dims = [in_features, 128, 64, 32, 16, out_features]
    params = []
    for d_in, d_out in zip(dims[:-1], dims[1:]):
        key, kw, kb = jax.random.split(key, 3)
        bound = 1.0 / (d_in ** 0.5)
        w = jax.random.uniform(kw, (d_in, d_out), dtype, minval=-bound, maxval=bound)
        b = jax.random.uniform(kb, (1, d_out), dtype, minval=-bound, maxval=bound)
        params.append((w, b))
    return params


def reference_forward_f32(x, params):
    """Pure f32 reference (matches the PyTorch module exactly)."""
    z = x
    for i, (w, b) in enumerate(params):
        z = z @ w + b
        if i < len(params) - 1:
            z = jnp.maximum(z, 0.0)
    return z


def reference_forward_matched(x, params, compute_dtype):
    """Reference using the kernel's precision (bf16 operands/activations, f32 accum, bf16 out)."""
    w1p, wr, b_all = _pack_params(params, compute_dtype)
    z = jnp.dot(x.astype(compute_dtype), w1p, preferred_element_type=jnp.float32)
    z = jnp.maximum(z + b_all[0:1, :], 0.0).astype(compute_dtype)
    for i in range(3):
        z = jnp.dot(z, wr[i], preferred_element_type=jnp.float32)
        z = jnp.maximum(z + b_all[i + 1:i + 2, :], 0.0).astype(compute_dtype)
    z = jnp.dot(z, wr[3], preferred_element_type=jnp.float32)
    z = (z + b_all[4:5, :]).astype(compute_dtype)
    out_features = params[-1][0].shape[1]
    return z[:, :out_features]


# TODO(synk): return_latent / return_penultimate_postact early-exit variants are not
# implemented in the kernel; only the default full forward path is fused here.

if __name__ == "__main__":
    key = jax.random.PRNGKey(0)
    in_features = 32
    out_features = 10
    batch = 16

    kx, kp = jax.random.split(key)
    x = jax.random.normal(kx, (batch, in_features), dtype=jnp.float32)
    params = init_params(kp, in_features, out_features)

    out = fully_connected_forward(x, params)
    out = jax.block_until_ready(out)
    assert out.shape == (batch, out_features)
    assert out.dtype == jnp.bfloat16

    # Primary check: matched-precision reference (bf16 operands/activations, f32 accum).
    ref_matched = reference_forward_matched(x, params, jnp.bfloat16)
    assert jnp.allclose(out.astype(jnp.float32), ref_matched.astype(jnp.float32),
                        atol=1e-2, rtol=1e-2), "mismatch vs matched-precision reference"

    # Full-f32 reference: loose tolerance accounts for bf16 operand/activation quantization.
    ref_f32 = reference_forward_f32(x, params)
    assert jnp.allclose(out.astype(jnp.float32), ref_f32, atol=1e-1, rtol=1e-1), \
        "mismatch vs f32 reference"

    # Exercise the multi-step (padded, grid > 1) path with a small forced tile.
    kx2 = jax.random.split(kx)[0]
    x2 = jax.random.normal(kx2, (300, in_features), dtype=jnp.float32)
    out2 = jax.block_until_ready(fully_connected_forward(x2, params, tile_b=128))
    assert out2.shape == (300, out_features)
    ref2 = reference_forward_matched(x2, params, jnp.bfloat16)
    assert jnp.allclose(out2.astype(jnp.float32), ref2.astype(jnp.float32),
                        atol=1e-2, rtol=1e-2), "mismatch on multi-step grid path"

    print("KERNEL_OK")
</pallas_src>

<mosaic_0001>
module attributes {stable_mosaic.version = 11 : i64} {
  func.func @_mlp_kernel(%arg0: i32, %arg1: memref<16x32xf32, #tpu.memory_space<vmem>>, %arg2: memref<32x128xbf16, #tpu.memory_space<vmem>>, %arg3: memref<4x128x128xbf16, #tpu.memory_space<vmem>>, %arg4: memref<5x128xf32, #tpu.memory_space<vmem>>, %arg5: memref<16x128xbf16, #tpu.memory_space<vmem>>) attributes {dimension_semantics = [#tpu.dimension_semantics<parallel>], iteration_bounds = array<i64: 1>, scalar_prefetch = 0 : i64, scratch_operands = 0 : i64, tpu.core_type = #tpu.core_type<tc>, window_params = [{transform_indices = @transform_0, window_bounds = array<i64: 16, 32>}, {pipeline_mode = #tpu.pipeline_mode<synchronous>, transform_indices = @transform_1, window_bounds = array<i64: 32, 128>}, {pipeline_mode = #tpu.pipeline_mode<synchronous>, transform_indices = @transform_2, window_bounds = array<i64: 4, 128, 128>}, {pipeline_mode = #tpu.pipeline_mode<synchronous>, transform_indices = @transform_3, window_bounds = array<i64: 5, 128>}, {transform_indices = @transform_4, window_bounds = array<i64: 16, 128>}]} {
    %c0 = arith.constant 0 : index
    %c0_0 = arith.constant 0 : index
    %0 = vector.load %arg1[%c0, %c0_0] : memref<16x32xf32, #tpu.memory_space<vmem>>, vector<16x32xf32>
    %1 = arith.truncf %0 : vector<16x32xf32> to vector<16x32xbf16>
    %c0_1 = arith.constant 0 : index
    %c0_2 = arith.constant 0 : index
    %2 = vector.load %arg2[%c0_1, %c0_2] : memref<32x128xbf16, #tpu.memory_space<vmem>>, vector<32x128xbf16>
    %cst = arith.constant dense<0.000000e+00> : vector<16x128xf32>
    %3 = tpu.matmul %1, %2, %cst {dimension_numbers = #tpu.dot_dimension_numbers<[1], [0], [0], [1], [0, 0, 1, 1], [], []>} : vector<16x32xbf16>, vector<32x128xbf16>, vector<16x128xf32> -> vector<16x128xf32>
    %c0_3 = arith.constant 0 : index
    %c0_4 = arith.constant 0 : index
    %4 = vector.load %arg4[%c0_3, %c0_4] : memref<5x128xf32, #tpu.memory_space<vmem>>, vector<1x128xf32>
    %5 = vector.broadcast %4 : vector<1x128xf32> to vector<16x128xf32>
    %6 = arith.addf %3, %5 : vector<16x128xf32>
    %cst_5 = arith.constant 0.000000e+00 : f32
    %7 = vector.broadcast %cst_5 : f32 to vector<16x128xf32>
    %8 = arith.maximumf %6, %7 : vector<16x128xf32>
    %9 = arith.truncf %8 : vector<16x128xf32> to vector<16x128xbf16>
    %c0_6 = arith.constant 0 : index
    %c0_7 = arith.constant 0 : index
    %c0_8 = arith.constant 0 : index
    %10 = vector.load %arg3[%c0_6, %c0_7, %c0_8] : memref<4x128x128xbf16, #tpu.memory_space<vmem>>, vector<1x128x128xbf16>
    %11 = vector.shape_cast %10 : vector<1x128x128xbf16> to vector<128x128xbf16>
    %cst_9 = arith.constant dense<0.000000e+00> : vector<16x128xf32>
    %12 = tpu.matmul %9, %11, %cst_9 {dimension_numbers = #tpu.dot_dimension_numbers<[1], [0], [0], [1], [0, 0, 1, 1], [], []>} : vector<16x128xbf16>, vector<128x128xbf16>, vector<16x128xf32> -> vector<16x128xf32>
    %c1 = arith.constant 1 : index
    %c0_10 = arith.constant 0 : index
    %13 = vector.load %arg4[%c1, %c0_10] : memref<5x128xf32, #tpu.memory_space<vmem>>, vector<1x128xf32>
    %14 = vector.broadcast %13 : vector<1x128xf32> to vector<16x128xf32>
    %15 = arith.addf %12, %14 : vector<16x128xf32>
    %cst_11 = arith.constant 0.000000e+00 : f32
    %16 = vector.broadcast %cst_11 : f32 to vector<16x128xf32>
    %17 = arith.maximumf %15, %16 : vector<16x128xf32>
    %18 = arith.truncf %17 : vector<16x128xf32> to vector<16x128xbf16>
    %c1_12 = arith.constant 1 : index
    %c0_13 = arith.constant 0 : index
    %c0_14 = arith.constant 0 : index
    %19 = vector.load %arg3[%c1_12, %c0_13, %c0_14] : memref<4x128x128xbf16, #tpu.memory_space<vmem>>, vector<1x128x128xbf16>
    %20 = vector.shape_cast %19 : vector<1x128x128xbf16> to vector<128x128xbf16>
    %cst_15 = arith.constant dense<0.000000e+00> : vector<16x128xf32>
    %21 = tpu.matmul %18, %20, %cst_15 {dimension_numbers = #tpu.dot_dimension_numbers<[1], [0], [0], [1], [0, 0, 1, 1], [], []>} : vector<16x128xbf16>, vector<128x128xbf16>, vector<16x128xf32> -> vector<16x128xf32>
    %c2 = arith.constant 2 : index
    %c0_16 = arith.constant 0 : index
    %22 = vector.load %arg4[%c2, %c0_16] : memref<5x128xf32, #tpu.memory_space<vmem>>, vector<1x128xf32>
    %23 = vector.broadcast %22 : vector<1x128xf32> to vector<16x128xf32>
    %24 = arith.addf %21, %23 : vector<16x128xf32>
    %cst_17 = arith.constant 0.000000e+00 : f32
    %25 = vector.broadcast %cst_17 : f32 to vector<16x128xf32>
    %26 = arith.maximumf %24, %25 : vector<16x128xf32>
    %27 = arith.truncf %26 : vector<16x128xf32> to vector<16x128xbf16>
    %c2_18 = arith.constant 2 : index
    %c0_19 = arith.constant 0 : index
    %c0_20 = arith.constant 0 : index
    %28 = vector.load %arg3[%c2_18, %c0_19, %c0_20] : memref<4x128x128xbf16, #tpu.memory_space<vmem>>, vector<1x128x128xbf16>
    %29 = vector.shape_cast %28 : vector<1x128x128xbf16> to vector<128x128xbf16>
    %cst_21 = arith.constant dense<0.000000e+00> : vector<16x128xf32>
    %30 = tpu.matmul %27, %29, %cst_21 {dimension_numbers = #tpu.dot_dimension_numbers<[1], [0], [0], [1], [0, 0, 1, 1], [], []>} : vector<16x128xbf16>, vector<128x128xbf16>, vector<16x128xf32> -> vector<16x128xf32>
    %c3 = arith.constant 3 : index
    %c0_22 = arith.constant 0 : index
    %31 = vector.load %arg4[%c3, %c0_22] : memref<5x128xf32, #tpu.memory_space<vmem>>, vector<1x128xf32>
    %32 = vector.broadcast %31 : vector<1x128xf32> to vector<16x128xf32>
    %33 = arith.addf %30, %32 : vector<16x128xf32>
    %cst_23 = arith.constant 0.000000e+00 : f32
    %34 = vector.broadcast %cst_23 : f32 to vector<16x128xf32>
    %35 = arith.maximumf %33, %34 : vector<16x128xf32>
    %36 = arith.truncf %35 : vector<16x128xf32> to vector<16x128xbf16>
    %c3_24 = arith.constant 3 : index
    %c0_25 = arith.constant 0 : index
    %c0_26 = arith.constant 0 : index
    %37 = vector.load %arg3[%c3_24, %c0_25, %c0_26] : memref<4x128x128xbf16, #tpu.memory_space<vmem>>, vector<1x128x128xbf16>
    %38 = vector.shape_cast %37 : vector<1x128x128xbf16> to vector<128x128xbf16>
    %cst_27 = arith.constant dense<0.000000e+00> : vector<16x128xf32>
    %39 = tpu.matmul %36, %38, %cst_27 {dimension_numbers = #tpu.dot_dimension_numbers<[1], [0], [0], [1], [0, 0, 1, 1], [], []>} : vector<16x128xbf16>, vector<128x128xbf16>, vector<16x128xf32> -> vector<16x128xf32>
    %c4 = arith.constant 4 : index
    %c0_28 = arith.constant 0 : index
    %40 = vector.load %arg4[%c4, %c0_28] : memref<5x128xf32, #tpu.memory_space<vmem>>, vector<1x128xf32>
    %41 = vector.broadcast %40 : vector<1x128xf32> to vector<16x128xf32>
    %42 = arith.addf %39, %41 : vector<16x128xf32>
    %43 = arith.truncf %42 : vector<16x128xf32> to vector<16x128xbf16>
    %c0_29 = arith.constant 0 : index
    %c0_30 = arith.constant 0 : index
    %44 = vector.load %arg5[%c0_29, %c0_30] : memref<16x128xbf16, #tpu.memory_space<vmem>>, vector<16x128xbf16>
    tpu.vector_store %arg5[%c0_29, %c0_30], %43 {strides = array<i32>} : memref<16x128xbf16, #tpu.memory_space<vmem>>, vector<16x128xbf16>,
    return
  }
  func.func @transform_0(%arg0: i32) -> (i32, i32) {
    %c0_i32 = arith.constant 0 : i32
    %c0_i32_0 = arith.constant 0 : i32
    return %arg0, %c0_i32 : i32, i32
  }
  func.func @transform_1(%arg0: i32) -> (i32, i32) {
    %c0_i32 = arith.constant 0 : i32
    %c0_i32_0 = arith.constant 0 : i32
    %c0_i32_1 = arith.constant 0 : i32
    return %c0_i32, %c0_i32_0 : i32, i32
  }
  func.func @transform_2(%arg0: i32) -> (i32, i32, i32) {
    %c0_i32 = arith.constant 0 : i32
    %c0_i32_0 = arith.constant 0 : i32
    %c0_i32_1 = arith.constant 0 : i32
    %c0_i32_2 = arith.constant 0 : i32
    return %c0_i32, %c0_i32_0, %c0_i32_1 : i32, i32, i32
  }
  func.func @transform_3(%arg0: i32) -> (i32, i32) {
    %c0_i32 = arith.constant 0 : i32
    %c0_i32_0 = arith.constant 0 : i32
    %c0_i32_1 = arith.constant 0 : i32
    return %c0_i32, %c0_i32_0 : i32, i32
  }
  func.func @transform_4(%arg0: i32) -> (i32, i32) {
    %c0_i32 = arith.constant 0 : i32
    %c0_i32_0 = arith.constant 0 : i32
    return %arg0, %c0_i32 : i32, i32
  }
}

</mosaic_0001>

<llo_original>
// kernel: tpu_custom_call.1
$region0: #{tpu_custom_call.1}
  #allocation0 [shape = 'u32[]', space=smem, size = 0x4, offset = 0x4, fixed_abs, tag = 'smem constant byte address 0x4 - core index']
  #allocation1 [shape = 'u32[72,128]{1,0:T(1,128)}', space=vmem, size = 0x9000, scoped, tag = 'internal scratch']
  %s0 = inlined_call_operand.hbm [shape: f32[16,32], index: 0, kind: input, shape index: {}]
  %s1 = inlined_call_operand.hbm [shape: bf16[32,128], index: 1, kind: input, shape index: {}]
  %s2 = inlined_call_operand.hbm [shape: bf16[4,128,128], index: 2, kind: input, shape index: {}]
  %s3 = inlined_call_operand.hbm [shape: f32[5,128], index: 3, kind: input, shape index: {}]
  %s4 = inlined_call_operand.hbm [shape: bf16[16,128], index: 4, kind: output, shape index: {}]
  %s5 = sld [smem:[#allocation0]]
  $region42: #{tpu_custom_call.1} parent=0
    _
  %s7 = ssub.s32 1, %s5
  %s8 = scalar_select 0, %s7, %s5
  $region1: #{tpu_custom_call.1} parent=0
    #allocation2 [shape = 'u8[8192]{0}', space=vmem, size = 0x2000, scoped, tag = 'input window, operand 0, single buffered']
    #allocation3 [shape = 's32[1]{0}', space=sflag, size = 0x4, scoped, tag = 'scoped memory for tpu_custom_call.1']
    #allocation4 [shape = 's32[1]{0}', space=sflag, size = 0x4, scoped, tag = 'scoped memory for tpu_custom_call.1']
    #allocation5 [shape = 'u8[8192]{0}', space=vmem, size = 0x2000, scoped, tag = 'input window, operand 1, single buffered']
    #allocation6 [shape = 's32[1]{0}', space=sflag, size = 0x4, scoped, tag = 'scoped memory for tpu_custom_call.1']
    #allocation7 [shape = 'u8[131072]{0}', space=vmem, size = 0x20000, scoped, tag = 'input window, operand 2, single buffered']
    #allocation8 [shape = 'u8[4096]{0}', space=vmem, size = 0x1000, scoped, tag = 'input window, operand 3, single buffered']
    #allocation9 [shape = 's32[1]{0}', space=sflag, size = 0x4, scoped, tag = 'scoped memory for tpu_custom_call.1']
    #allocation10 [shape = 'u8[4096]{0}', space=vmem, size = 0x1000, scoped, tag = 'output window, operand 0, single buffered']
    %9 = vsyncpa [#allocation3], 0
    %10 = vsyncpa [#allocation6], 0
    %11 = vsyncpa [#allocation9], 0
    %12 = vsyncpa [#allocation4], 0
    // Predicated region
    $region2: #{tpu_custom_call.1} parent=1 // pred_check
      _
    $region3: #{tpu_custom_call.1} parent=1 // pred_check_branch
      %14 = sbr.rel (0) target = $region5
    $region4: #{tpu_custom_call.1} parent=1 // pred_region
      %16 = vsyncadd [#allocation3], 0
      %s17 = sshll.u32 %s0, 4
      %s18 = int_to_ptr.hbm [resolvable:$true] %s17
      %s19 = sshll.u32 [#allocation2], 4
      %s20 = int_to_ptr.vmem [resolvable:$true] %s19
      %25 = dma.hbm_to_vmem [thread:$0]  %s18, 256, %s20, [#allocation3], 128, 128, 8
    $region5: #{tpu_custom_call.1} parent=1 // pred_fallthru
      _
    // Predicated region
    $region6: #{tpu_custom_call.1} parent=1 // pred_check
      _
    $region7: #{tpu_custom_call.1} parent=1 // pred_check_branch
      %27 = sbr.rel (0) target = $region9
    $region8: #{tpu_custom_call.1} parent=1 // pred_region
      %29 = vsyncadd [#allocation6], 0
      %s30 = sshll.u32 %s1, 4
      %s31 = int_to_ptr.hbm [resolvable:$true] %s30
      %s32 = sshll.u32 [#allocation5], 4
      %s33 = int_to_ptr.vmem [resolvable:$true] %s32
      %38 = dma.hbm_to_vmem [thread:$0]  %s31, 256, %s33, [#allocation6], 64, 64, 4
    $region9: #{tpu_custom_call.1} parent=1 // pred_fallthru
      _
    // Predicated region
    $region10: #{tpu_custom_call.1} parent=1 // pred_check
      _
    $region11: #{tpu_custom_call.1} parent=1 // pred_check_branch
      %40 = sbr.rel (0) target = $region13
    $region12: #{tpu_custom_call.1} parent=1 // pred_region
      %42 = vsyncadd [#allocation6], 0
      %s43 = sshll.u32 %s2, 4
      %s44 = int_to_ptr.hbm [resolvable:$true] %s43
      %s45 = sshll.u32 [#allocation7], 4
      %s46 = int_to_ptr.vmem [resolvable:$true] %s45
      %51 = dma.hbm_to_vmem [thread:$0]  %s44, 4096, %s46, [#allocation6], 64, 64, 4
    $region13: #{tpu_custom_call.1} parent=1 // pred_fallthru
      _
    // Predicated region
    $region14: #{tpu_custom_call.1} parent=1 // pred_check
      _
    $region15: #{tpu_custom_call.1} parent=1 // pred_check_branch
      %53 = sbr.rel (0) target = $region17
    $region16: #{tpu_custom_call.1} parent=1 // pred_region
      %55 = vsyncadd [#allocation9], 0
      %s57 = sshll.u32 %s3, 4
      %s58 = int_to_ptr.hbm [resolvable:$true] %s57
      %s59 = sshll.u32 [#allocation8], 4
      %s60 = int_to_ptr.vmem [resolvable:$true] %s59
      %62 = dma.hbm_to_vmem [thread:$0]  %s58, 128, %s60, [#allocation9]
    $region17: #{tpu_custom_call.1} parent=1 // pred_fallthru
      _
    // Predicated region
    $region18: #{tpu_custom_call.1} parent=1 // pred_check
      _
    $region19: #{tpu_custom_call.1} parent=1 // pred_check_branch
      %64 = sbr.rel (0) target = $region21
    $region20: #{tpu_custom_call.1} parent=1 // pred_region
      %66 = dma.done [#allocation3], 256
    $region21: #{tpu_custom_call.1} parent=1 // pred_fallthru
      _
    // Predicated region
    $region22: #{tpu_custom_call.1} parent=1 // pred_check
      _
    $region23: #{tpu_custom_call.1} parent=1 // pred_check_branch
      %68 = sbr.rel (0) target = $region25
    $region24: #{tpu_custom_call.1} parent=1 // pred_region
      %70 = dma.done [#allocation6], 256
    $region25: #{tpu_custom_call.1} parent=1 // pred_fallthru
      _
    // Predicated region
    $region26: #{tpu_custom_call.1} parent=1 // pred_check
      _
    $region27: #{tpu_custom_call.1} parent=1 // pred_check_branch
      %72 = sbr.rel (0) target = $region29
    $region28: #{tpu_custom_call.1} parent=1 // pred_region
      %74 = dma.done [#allocation6], 4096
    $region29: #{tpu_custom_call.1} parent=1 // pred_fallthru
      _
    // Predicated region
    $region30: #{tpu_custom_call.1} parent=1 // pred_check
      _
    $region31: #{tpu_custom_call.1} parent=1 // pred_check_branch
      %76 = sbr.rel (0) target = $region33
    $region32: #{tpu_custom_call.1} parent=1 // pred_region
      %78 = dma.done [#allocation9], 128
    $region33: #{tpu_custom_call.1} parent=1 // pred_fallthru
      _
    %v80 = vld [vmem:[#allocation2] sm:$0xff]
    %v81 = vld [vmem:[#allocation2 + $0x8] sm:$0xff]
    %v82 = vpack.c.bf16 %v81, %v80
    %v83 = vld [vmem:[#allocation5] sm:$0xf]
    %v84 = vld [vmem:[#allocation5 + $0x4] sm:$0xf]
    %v85 = vld [vmem:[#allocation5 + $0x8] sm:$0xf]
    %v86 = vld [vmem:[#allocation5 + $0xc] sm:$0xf]
    %v87 = vld [vmem:[#allocation8] sm:$0x1]
    %v88 = vperm.slane %v87, 0
    %v93 = vunpack.c.l.b16 %v83
    %v94 = vunpack.c.l.b16 %v84
    %v95 = vunpack.c.l.b16 %v85
    %v96 = vunpack.c.l.b16 %v86
    %v97 = vpack.c.b16 %v94, %v93
    %v98 = vpack.c.b16 %v96, %v95
    %vm101 = vcmask 261120
    %v103 = vsel %vm101, %v82, 0
    %105 = vmatpush.bf16.msra.mxu0 0
    %106 = vmatpush.bf16.msra.mxu0 0
    %107 = vmatpush.bf16.msra.mxu0 0
    %108 = vmatpush.bf16.msra.mxu0 0
    %109 = vmatpush.bf16.msra.mxu0 0
    %110 = vmatpush.bf16.msra.mxu0 0
    %111 = vmatpush.bf16.msra.mxu0 %v98
    %112 = vmatpush.bf16.msra.mxu0 %v97
    %113 = vmatmul.bf16.gmra.mxu0 %v103
    %v114 = vpop.f32.mrf.mxu0
    %v115 = vadd.f32 %v88, %v114
    %v116 = vpop.f32.mrf.mxu0
    %v117 = vadd.f32 %v88, %v116
    %118 = vdwg.mxu0
    %v119 = vmax.f32 %v115, 0.0
    %v120 = vmax.f32 %v117, 0.0
    %v121 = vpack.c.bf16 %v120, %v119
    %v122 = vld [vmem:[#allocation7] sm:$0xf]
    %v123 = vld [vmem:[#allocation7 + $0x4] sm:$0xf]
    %v124 = vld [vmem:[#allocation7 + $0x8] sm:$0xf]
    %v125 = vld [vmem:[#allocation7 + $0xc] sm:$0xf]
    %v126 = vld [vmem:[#allocation7 + $0x10] sm:$0xf]
    %v127 = vld [vmem:[#allocation7 + $0x14] sm:$0xf]
    %v128 = vld [vmem:[#allocation7 + $0x18] sm:$0xf]
    %v129 = vld [vmem:[#allocation7 + $0x1c] sm:$0xf]
    %v130 = vld [vmem:[#allocation7 + $0x20] sm:$0xf]
    %v131 = vld [vmem:[#allocation7 + $0x24] sm:$0xf]
    %v132 = vld [vmem:[#allocation7 + $0x28] sm:$0xf]
    %v133 = vld [vmem:[#allocation7 + $0x2c] sm:$0xf]
    %v134 = vld [vmem:[#allocation7 + $0x30] sm:$0xf]
    %v135 = vld [vmem:[#allocation7 + $0x34] sm:$0xf]
    %v136 = vld [vmem:[#allocation7 + $0x38] sm:$0xf]
    %v137 = vld [vmem:[#allocation7 + $0x3c] sm:$0xf]
    %v138 = vld [vmem:[#allocation8 + $0x1] sm:$0x1]
    %v139 = vperm.slane %v138, 0
    %v156 = vunpack.c.l.b16 %v122
    %v157 = vunpack.c.l.b16 %v123
    %v158 = vunpack.c.l.b16 %v124
    %v159 = vunpack.c.l.b16 %v125
    %v160 = vunpack.c.l.b16 %v126
    %v161 = vunpack.c.l.b16 %v127
    %v162 = vunpack.c.l.b16 %v128
    %v163 = vunpack.c.l.b16 %v129
    %v164 = vunpack.c.l.b16 %v130
    %v165 = vunpack.c.l.b16 %v131
    %v166 = vunpack.c.l.b16 %v132
    %v167 = vunpack.c.l.b16 %v133
    %v168 = vunpack.c.l.b16 %v134
    %v169 = vunpack.c.l.b16 %v135
    %v170 = vunpack.c.l.b16 %v136
    %v171 = vunpack.c.l.b16 %v137
    %v172 = vpack.c.b16 %v157, %v156
    %v173 = vpack.c.b16 %v159, %v158
    %v174 = vpack.c.b16 %v161, %v160
    %v175 = vpack.c.b16 %v163, %v162
    %v176 = vpack.c.b16 %v165, %v164
    %v177 = vpack.c.b16 %v167, %v166
    %v178 = vpack.c.b16 %v169, %v168
    %v179 = vpack.c.b16 %v171, %v170
    %188 = vmatpush.bf16.msra.mxu0 %v179
    %189 = vmatpush.bf16.msra.mxu0 %v178
    %190 = vmatpush.bf16.msra.mxu0 %v177
    %191 = vmatpush.bf16.msra.mxu0 %v176
    %192 = vmatpush.bf16.msra.mxu0 %v175
    %193 = vmatpush.bf16.msra.mxu0 %v174
    %194 = vmatpush.bf16.msra.mxu0 %v173
    %195 = vmatpush.bf16.msra.mxu0 %v172
    %196 = vmatmul.bf16.gmra.mxu0 %v121
    %v197 = vpop.f32.mrf.mxu0
    %v198 = vadd.f32 %v139, %v197
    %v199 = vpop.f32.mrf.mxu0
    %v200 = vadd.f32 %v139, %v199
    %201 = vdwg.mxu0
    %v202 = vmax.f32 %v198, 0.0
    %v203 = vmax.f32 %v200, 0.0
    %v204 = vpack.c.bf16 %v203, %v202
    %s205 = scalar_lea.vmem [#allocation7], 64
    %v206 = vld [vmem:[%s205] sm:$0xf]
    %v207 = vld [vmem:[%s205 + $0x4] sm:$0xf]
    %v208 = vld [vmem:[%s205 + $0x8] sm:$0xf]
    %v209 = vld [vmem:[%s205 + $0xc] sm:$0xf]
    %v210 = vld [vmem:[%s205 + $0x10] sm:$0xf]
    %v211 = vld [vmem:[%s205 + $0x14] sm:$0xf]
    %v212 = vld [vmem:[%s205 + $0x18] sm:$0xf]
    %v213 = vld [vmem:[%s205 + $0x1c] sm:$0xf]
    %v214 = vld [vmem:[%s205 + $0x20] sm:$0xf]
    %v215 = vld [vmem:[%s205 + $0x24] sm:$0xf]
    %v216 = vld [vmem:[%s205 + $0x28] sm:$0xf]
    %v217 = vld [vmem:[%s205 + $0x2c] sm:$0xf]
    %v218 = vld [vmem:[%s205 + $0x30] sm:$0xf]
    %v219 = vld [vmem:[%s205 + $0x34] sm:$0xf]
    %v220 = vld [vmem:[%s205 + $0x38] sm:$0xf]
    %v221 = vld [vmem:[%s205 + $0x3c] sm:$0xf]
    %v222 = vld [vmem:[#allocation8 + $0x2] sm:$0x1]
    %v223 = vperm.slane %v222, 0
    %v240 = vunpack.c.l.b16 %v206
    %v241 = vunpack.c.l.b16 %v207
    %v242 = vunpack.c.l.b16 %v208
    %v243 = vunpack.c.l.b16 %v209
    %v244 = vunpack.c.l.b16 %v210
    %v245 = vunpack.c.l.b16 %v211
    %v246 = vunpack.c.l.b16 %v212
    %v247 = vunpack.c.l.b16 %v213
    %v248 = vunpack.c.l.b16 %v214
    %v249 = vunpack.c.l.b16 %v215
    %v250 = vunpack.c.l.b16 %v216
    %v251 = vunpack.c.l.b16 %v217
    %v252 = vunpack.c.l.b16 %v218
    %v253 = vunpack.c.l.b16 %v219
    %v254 = vunpack.c.l.b16 %v220
    %v255 = vunpack.c.l.b16 %v221
    %v256 = vpack.c.b16 %v241, %v240
    %v257 = vpack.c.b16 %v243, %v242
    %v258 = vpack.c.b16 %v245, %v244
    %v259 = vpack.c.b16 %v247, %v246
    %v260 = vpack.c.b16 %v249, %v248
    %v261 = vpack.c.b16 %v251, %v250
    %v262 = vpack.c.b16 %v253, %v252
    %v263 = vpack.c.b16 %v255, %v254
    %272 = vmatpush.bf16.msra.mxu0 %v263
    %273 = vmatpush.bf16.msra.mxu0 %v262
    %274 = vmatpush.bf16.msra.mxu0 %v261
    %275 = vmatpush.bf16.msra.mxu0 %v260
    %276 = vmatpush.bf16.msra.mxu0 %v259
    %277 = vmatpush.bf16.msra.mxu0 %v258
    %278 = vmatpush.bf16.msra.mxu0 %v257
    %279 = vmatpush.bf16.msra.mxu0 %v256
    %280 = vmatmul.bf16.gmra.mxu0 %v204
    %v281 = vpop.f32.mrf.mxu0
    %v282 = vadd.f32 %v223, %v281
    %v283 = vpop.f32.mrf.mxu0
    %v284 = vadd.f32 %v223, %v283
    %285 = vdwg.mxu0
    %v286 = vmax.f32 %v282, 0.0
    %v287 = vmax.f32 %v284, 0.0
    %v288 = vpack.c.bf16 %v287, %v286
    %s289 = scalar_lea.vmem [#allocation7], 128
    %v290 = vld [vmem:[%s289] sm:$0xf]
    %v291 = vld [vmem:[%s289 + $0x4] sm:$0xf]
    %v292 = vld [vmem:[%s289 + $0x8] sm:$0xf]
    %v293 = vld [vmem:[%s289 + $0xc] sm:$0xf]
    %v294 = vld [vmem:[%s289 + $0x10] sm:$0xf]
    %v295 = vld [vmem:[%s289 + $0x14] sm:$0xf]
    %v296 = vld [vmem:[%s289 + $0x18] sm:$0xf]
    %v297 = vld [vmem:[%s289 + $0x1c] sm:$0xf]
    %v298 = vld [vmem:[%s289 + $0x20] sm:$0xf]
    %v299 = vld [vmem:[%s289 + $0x24] sm:$0xf]
    %v300 = vld [vmem:[%s289 + $0x28] sm:$0xf]
    %v301 = vld [vmem:[%s289 + $0x2c] sm:$0xf]
    %v302 = vld [vmem:[%s289 + $0x30] sm:$0xf]
    %v303 = vld [vmem:[%s289 + $0x34] sm:$0xf]
    %v304 = vld [vmem:[%s289 + $0x38] sm:$0xf]
    %v305 = vld [vmem:[%s289 + $0x3c] sm:$0xf]
    %v306 = vld [vmem:[#allocation8 + $0x3] sm:$0x1]
    %v307 = vperm.slane %v306, 0
    %v324 = vunpack.c.l.b16 %v290
    %v325 = vunpack.c.l.b16 %v291
    %v326 = vunpack.c.l.b16 %v292
    %v327 = vunpack.c.l.b16 %v293
    %v328 = vunpack.c.l.b16 %v294
    %v329 = vunpack.c.l.b16 %v295
    %v330 = vunpack.c.l.b16 %v296
    %v331 = vunpack.c.l.b16 %v297
    %v332 = vunpack.c.l.b16 %v298
    %v333 = vunpack.c.l.b16 %v299
    %v334 = vunpack.c.l.b16 %v300
    %v335 = vunpack.c.l.b16 %v301
    %v336 = vunpack.c.l.b16 %v302
    %v337 = vunpack.c.l.b16 %v303
    %v338 = vunpack.c.l.b16 %v304
    %v339 = vunpack.c.l.b16 %v305
    %v340 = vpack.c.b16 %v325, %v324
    %v341 = vpack.c.b16 %v327, %v326
    %v342 = vpack.c.b16 %v329, %v328
    %v343 = vpack.c.b16 %v331, %v330
    %v344 = vpack.c.b16 %v333, %v332
    %v345 = vpack.c.b16 %v335, %v334
    %v346 = vpack.c.b16 %v337, %v336
    %v347 = vpack.c.b16 %v339, %v338
    %356 = vmatpush.bf16.msra.mxu0 %v347
    %357 = vmatpush.bf16.msra.mxu0 %v346
    %358 = vmatpush.bf16.msra.mxu0 %v345
    %359 = vmatpush.bf16.msra.mxu0 %v344
    %360 = vmatpush.bf16.msra.mxu0 %v343
    %361 = vmatpush.bf16.msra.mxu0 %v342
    %362 = vmatpush.bf16.msra.mxu0 %v341
    %363 = vmatpush.bf16.msra.mxu0 %v340
    %364 = vmatmul.bf16.gmra.mxu0 %v288
    %v365 = vpop.f32.mrf.mxu0
    %v366 = vadd.f32 %v307, %v365
    %v367 = vpop.f32.mrf.mxu0
    %v368 = vadd.f32 %v307, %v367
    %369 = vdwg.mxu0
    %v370 = vmax.f32 %v366, 0.0
    %v371 = vmax.f32 %v368, 0.0
    %v372 = vpack.c.bf16 %v371, %v370
    %s373 = scalar_lea.vmem [#allocation7], 192
    %v374 = vld [vmem:[%s373] sm:$0xf]
    %v375 = vld [vmem:[%s373 + $0x4] sm:$0xf]
    %v376 = vld [vmem:[%s373 + $0x8] sm:$0xf]
    %v377 = vld [vmem:[%s373 + $0xc] sm:$0xf]
    %v378 = vld [vmem:[%s373 + $0x10] sm:$0xf]
    %v379 = vld [vmem:[%s373 + $0x14] sm:$0xf]
    %v380 = vld [vmem:[%s373 + $0x18] sm:$0xf]
    %v381 = vld [vmem:[%s373 + $0x1c] sm:$0xf]
    %v382 = vld [vmem:[%s373 + $0x20] sm:$0xf]
    %v383 = vld [vmem:[%s373 + $0x24] sm:$0xf]
    %v384 = vld [vmem:[%s373 + $0x28] sm:$0xf]
    %v385 = vld [vmem:[%s373 + $0x2c] sm:$0xf]
    %v386 = vld [vmem:[%s373 + $0x30] sm:$0xf]
    %v387 = vld [vmem:[%s373 + $0x34] sm:$0xf]
    %v388 = vld [vmem:[%s373 + $0x38] sm:$0xf]
    %v389 = vld [vmem:[%s373 + $0x3c] sm:$0xf]
    %v390 = vld [vmem:[#allocation8 + $0x4] sm:$0x1]
    %v391 = vperm.slane %v390, 0
    %v408 = vunpack.c.l.b16 %v374
    %v409 = vunpack.c.l.b16 %v375
    %v410 = vunpack.c.l.b16 %v376
    %v411 = vunpack.c.l.b16 %v377
    %v412 = vunpack.c.l.b16 %v378
    %v413 = vunpack.c.l.b16 %v379
    %v414 = vunpack.c.l.b16 %v380
    %v415 = vunpack.c.l.b16 %v381
    %v416 = vunpack.c.l.b16 %v382
    %v417 = vunpack.c.l.b16 %v383
    %v418 = vunpack.c.l.b16 %v384
    %v419 = vunpack.c.l.b16 %v385
    %v420 = vunpack.c.l.b16 %v386
    %v421 = vunpack.c.l.b16 %v387
    %v422 = vunpack.c.l.b16 %v388
    %v423 = vunpack.c.l.b16 %v389
    %v424 = vpack.c.b16 %v409, %v408
    %v425 = vpack.c.b16 %v411, %v410
    %v426 = vpack.c.b16 %v413, %v412
    %v427 = vpack.c.b16 %v415, %v414
    %v428 = vpack.c.b16 %v417, %v416
    %v429 = vpack.c.b16 %v419, %v418
    %v430 = vpack.c.b16 %v421, %v420
    %v431 = vpack.c.b16 %v423, %v422
    %440 = vmatpush.bf16.msra.mxu0 %v431
    %441 = vmatpush.bf16.msra.mxu0 %v430
    %442 = vmatpush.bf16.msra.mxu0 %v429
    %443 = vmatpush.bf16.msra.mxu0 %v428
    %444 = vmatpush.bf16.msra.mxu0 %v427
    %445 = vmatpush.bf16.msra.mxu0 %v426
    %446 = vmatpush.bf16.msra.mxu0 %v425
    %447 = vmatpush.bf16.msra.mxu0 %v424
    %448 = vmatmul.bf16.gmra.mxu0 %v372
    %v449 = vpop.f32.mrf.mxu0
    %v450 = vadd.f32 %v391, %v449
    %v451 = vpop.f32.mrf.mxu0
    %v452 = vadd.f32 %v391, %v451
    %453 = vdwg.mxu0
    %v454 = vpack.c.bf16 %v450, %v450
    %v455 = vpack.c.bf16 %v452, %v452
    %456 = vst [vmem:[#allocation10] sm:$0xf] %v454
    %457 = vst [vmem:[#allocation10 + $0x4] sm:$0xf] %v455
    // Predicated region
    $region34: #{tpu_custom_call.1} parent=1 // pred_check
      _
    $region35: #{tpu_custom_call.1} parent=1 // pred_check_branch
      %459 = sbr.rel (0) target = $region37
    $region36: #{tpu_custom_call.1} parent=1 // pred_region
      %461 = vsyncadd [#allocation4], 0
      %s462 = sshll.u32 [#allocation10], 4
      %s463 = int_to_ptr.vmem [resolvable:$true] %s462
      %s464 = sshll.u32 %s4, 4
      %s465 = int_to_ptr.hbm [resolvable:$true] %s464
      %470 = dma.vmem_to_hbm [thread:$0]  %s463, 128, %s465, [#allocation4], 64, 64, 4
    $region37: #{tpu_custom_call.1} parent=1 // pred_fallthru
      _
    // Predicated region
    $region38: #{tpu_custom_call.1} parent=1 // pred_check
      _
    $region39: #{tpu_custom_call.1} parent=1 // pred_check_branch
      %472 = sbr.rel (0) target = $region41
    $region40: #{tpu_custom_call.1} parent=1 // pred_region
      %474 = dma.done [#allocation4], 128
    $region41: #{tpu_custom_call.1} parent=1 // pred_fallthru
      _
    %475 = vsyncpa [#allocation3], 1
    %476 = vsyncpa [#allocation6], 1
    %477 = vsyncpa [#allocation9], 1
    %478 = vsyncpa [#allocation4], 1

</llo_original>
